<compile_context>
chip_gen: v7x
topology: tpu7x:2x2x1
jax: 0.10.0
libtpu: 0.0.40
codegen_flags: <defaults>
</compile_context>

<pallas_src>
import jax
import jax.numpy as jnp
from jax.experimental import pallas as pl
from jax.experimental.pallas import tpu as pltpu


def _critic_kernel(x_ref, w1_ref, b1_ref, w2_ref, b2_ref, w3_ref, b3_ref, out_ref):
    x = x_ref[...]                                              # (bm, S)

    # Layer 1: (bm, S) @ (S, H) on the MXU, f32 accumulation, bias/ReLU on VPU.
    h1 = jnp.dot(x.astype(w1_ref.dtype), w1_ref[...],
                 preferred_element_type=jnp.float32) + b1_ref[...]
    h1 = jnp.maximum(h1, 0.0)

    # Layer 2: (bm, H) @ (H, 2H).
    h2 = jnp.dot(h1.astype(w2_ref.dtype), w2_ref[...],
                 preferred_element_type=jnp.float32) + b2_ref[...]
    h2 = jnp.maximum(h2, 0.0)                                   # (bm, 2H)

    # Layer 3 (out_features == 1): contract over the feature axis against the
    # (1, 2H) weight row so the result lands as a lane-dense (1, bm) row.  This
    # keeps every output store a full-width vst instead of a masked (bm, 1)
    # column write (1 of 128 lanes per row).
    v = jnp.einsum("oh,bh->ob", w3_ref[...], h2.astype(w3_ref.dtype),
                   preferred_element_type=jnp.float32) + b3_ref[...]   # (1, bm)
    out_ref[...] = v[None].astype(out_ref.dtype)                # (1, 1, bm)


def critic_forward(state, params, *, bm=1024):
    """state: [B, state_size].  Returns value: [B, 1] float32.

    `bm` is the batch tile (rows per grid step).  Sweep 512-2048 for large
    batches; it is automatically capped / rounded for small or awkward B.
    """
    w1, b1, w2, b2, w3, b3 = params
    B, S = state.shape
    H = w1.shape[1]
    H2 = w2.shape[1]
    assert w3.shape == (1, H2) and b3.shape == (1, 1)

    # Effective tile: never larger than the sublane-padded batch, always a
    # multiple of 8 so the (bm, S) state block has a legal sublane count.
    bm_eff = min(int(bm), ((B + 7) // 8) * 8)
    bm_eff = max(8, ((bm_eff + 7) // 8) * 8)
    grid_m = pl.cdiv(B, bm_eff)          # no divisibility requirement on B
    Bp = grid_m * bm_eff
    if Bp != B:
        state = jnp.pad(state, ((0, Bp - B), (0, 0)))

    # Weights/biases are tiny (~10 KB total): keep them fully resident
    # (same block index every grid step).
    full = lambda shape: pl.BlockSpec(shape, lambda i: (0,) * len(shape))

    out = pl.pallas_call(
        _critic_kernel,
        # (grid, 1, bm) lane-dense output slab; reshaped to (B, 1) in the
        # wrapper (layout plumbing on a tiny array).
        out_shape=jax.ShapeDtypeStruct((grid_m, 1, bm_eff), jnp.float32),
        grid_spec=pltpu.PrefetchScalarGridSpec(
            num_scalar_prefetch=0,
            grid=(grid_m,),
            in_specs=[
                pl.BlockSpec((bm_eff, S), lambda i: (i, 0)),  # state tile
                full((S, H)),    # w1  [in, out]
                full((1, H)),    # b1
                full((H, H2)),   # w2  [in, out]
                full((1, H2)),   # b2
                full((1, H2)),   # w3 kept as its (1, 2H) row
                full((1, 1)),    # b3
            ],
            out_specs=pl.BlockSpec((1, 1, bm_eff), lambda i: (i, 0, 0)),
        ),
        compiler_params=pltpu.CompilerParams(
            # Batch axis is embarrassingly parallel -> megacore sharding on v7x.
            dimension_semantics=("parallel",),
        ),
    )(state, w1, b1, w2, b2, w3, b3)

    return out.reshape(Bp, 1)[:B]


def init_critic_params(key, state_size, hidden_size, dtype=jnp.float32):
    """Matches nn.Linear init U(-1/sqrt(fan_in), 1/sqrt(fan_in)).

    w1/w2 are stored transposed as [in, out]; w3 is kept as its PyTorch
    (1, 2*hidden) row.  Biases stay float32 (VPU elementwise work stays f32
    even if `dtype` is bfloat16 for the matmul weights)."""
    def uniform(k, shape, fan_in, dt):
        bound = 1.0 / float(fan_in) ** 0.5
        return jax.random.uniform(k, shape, jnp.float32, -bound, bound).astype(dt)

    H, H2 = hidden_size, 2 * hidden_size
    k = jax.random.split(key, 6)
    w1 = uniform(k[0], (state_size, H), state_size, dtype)
    b1 = uniform(k[1], (1, H), state_size, jnp.float32)
    w2 = uniform(k[2], (H, H2), H, dtype)
    b2 = uniform(k[3], (1, H2), H, jnp.float32)
    w3 = uniform(k[4], (1, H2), H2, dtype)
    b3 = uniform(k[5], (1, 1), H2, jnp.float32)
    return (w1, b1, w2, b2, w3, b3)


def critic_reference(state, params):
    w1, b1, w2, b2, w3, b3 = params
    f32 = jnp.float32
    h1 = jnp.maximum(state.astype(f32) @ w1.astype(f32) + b1, 0.0)
    h2 = jnp.maximum(h1 @ w2.astype(f32) + b2, 0.0)
    return h2 @ w3.astype(f32).T + b3


if __name__ == "__main__":
    state_size, action_size, hidden_size = 16, 4, 32  # action_size unused by forward
    key = jax.random.PRNGKey(0)
    k_params, k_s1, k_s2 = jax.random.split(key, 3)
    params = init_critic_params(k_params, state_size, hidden_size)

    # Small demo batch (single grid step; bm is capped to the padded batch).
    state = jax.random.normal(k_s1, (8, state_size), jnp.float32)
    value = jax.block_until_ready(critic_forward(state, params))
    ref = critic_reference(state, params)
    assert value.shape == (8, 1)
    assert jnp.allclose(value, ref, atol=1e-4, rtol=1e-4)

    # Larger, non-divisible batch: exercises the multi-step parallel grid and
    # the wrapper-side padding path (bm=256 -> 4 grid steps, last tile padded).
    state2 = jax.random.normal(k_s2, (1000, state_size), jnp.float32)
    value2 = jax.block_until_ready(critic_forward(state2, params, bm=256))
    ref2 = critic_reference(state2, params)
    assert value2.shape == (1000, 1)
    assert jnp.allclose(value2, ref2, atol=1e-4, rtol=1e-4)

    print("KERNEL_OK")
</pallas_src>

<mosaic_0001>
module attributes {stable_mosaic.version = 11 : i64} {
  func.func @_critic_kernel(%arg0: i32, %arg1: memref<8x16xf32, #tpu.memory_space<vmem>>, %arg2: memref<16x32xf32, #tpu.memory_space<vmem>>, %arg3: memref<1x32xf32, #tpu.memory_space<vmem>>, %arg4: memref<32x64xf32, #tpu.memory_space<vmem>>, %arg5: memref<1x64xf32, #tpu.memory_space<vmem>>, %arg6: memref<1x64xf32, #tpu.memory_space<vmem>>, %arg7: memref<1x1xf32, #tpu.memory_space<vmem>>, %arg8: memref<1x1x8xf32, #tpu.memory_space<vmem>>) attributes {dimension_semantics = [#tpu.dimension_semantics<parallel>], iteration_bounds = array<i64: 1>, scalar_prefetch = 0 : i64, scratch_operands = 0 : i64, tpu.core_type = #tpu.core_type<tc>, window_params = [{transform_indices = @transform_0, window_bounds = array<i64: 8, 16>}, {pipeline_mode = #tpu.pipeline_mode<synchronous>, transform_indices = @transform_1, window_bounds = array<i64: 16, 32>}, {pipeline_mode = #tpu.pipeline_mode<synchronous>, transform_indices = @transform_2, window_bounds = array<i64: 1, 32>}, {pipeline_mode = #tpu.pipeline_mode<synchronous>, transform_indices = @transform_3, window_bounds = array<i64: 32, 64>}, {pipeline_mode = #tpu.pipeline_mode<synchronous>, transform_indices = @transform_4, window_bounds = array<i64: 1, 64>}, {pipeline_mode = #tpu.pipeline_mode<synchronous>, transform_indices = @transform_5, window_bounds = array<i64: 1, 64>}, {pipeline_mode = #tpu.pipeline_mode<synchronous>, transform_indices = @transform_6, window_bounds = array<i64: 1, 1>}, {transform_indices = @transform_7, window_bounds = array<i64: 1, 1, 8>}]} {
    %c0 = arith.constant 0 : index
    %c0_0 = arith.constant 0 : index
    %0 = vector.load %arg1[%c0, %c0_0] : memref<8x16xf32, #tpu.memory_space<vmem>>, vector<8x16xf32>
    %c0_1 = arith.constant 0 : index
    %c0_2 = arith.constant 0 : index
    %1 = vector.load %arg2[%c0_1, %c0_2] : memref<16x32xf32, #tpu.memory_space<vmem>>, vector<16x32xf32>
    %cst = arith.constant dense<0.000000e+00> : vector<8x32xf32>
    %2 = tpu.matmul %0, %1, %cst {dimension_numbers = #tpu.dot_dimension_numbers<[1], [0], [0], [1], [0, 0, 1, 1], [], []>} : vector<8x16xf32>, vector<16x32xf32>, vector<8x32xf32> -> vector<8x32xf32>
    %c0_3 = arith.constant 0 : index
    %c0_4 = arith.constant 0 : index
    %3 = vector.load %arg3[%c0_3, %c0_4] : memref<1x32xf32, #tpu.memory_space<vmem>>, vector<1x32xf32>
    %4 = vector.broadcast %3 : vector<1x32xf32> to vector<8x32xf32>
    %5 = arith.addf %2, %4 : vector<8x32xf32>
    %cst_5 = arith.constant 0.000000e+00 : f32
    %6 = vector.broadcast %cst_5 : f32 to vector<8x32xf32>
    %7 = arith.maximumf %5, %6 : vector<8x32xf32>
    %c0_6 = arith.constant 0 : index
    %c0_7 = arith.constant 0 : index
    %8 = vector.load %arg4[%c0_6, %c0_7] : memref<32x64xf32, #tpu.memory_space<vmem>>, vector<32x64xf32>
    %cst_8 = arith.constant dense<0.000000e+00> : vector<8x64xf32>
    %9 = tpu.matmul %7, %8, %cst_8 {dimension_numbers = #tpu.dot_dimension_numbers<[1], [0], [0], [1], [0, 0, 1, 1], [], []>} : vector<8x32xf32>, vector<32x64xf32>, vector<8x64xf32> -> vector<8x64xf32>
    %c0_9 = arith.constant 0 : index
    %c0_10 = arith.constant 0 : index
    %10 = vector.load %arg5[%c0_9, %c0_10] : memref<1x64xf32, #tpu.memory_space<vmem>>, vector<1x64xf32>
    %11 = vector.broadcast %10 : vector<1x64xf32> to vector<8x64xf32>
    %12 = arith.addf %9, %11 : vector<8x64xf32>
    %cst_11 = arith.constant 0.000000e+00 : f32
    %13 = vector.broadcast %cst_11 : f32 to vector<8x64xf32>
    %14 = arith.maximumf %12, %13 : vector<8x64xf32>
    %c0_12 = arith.constant 0 : index
    %c0_13 = arith.constant 0 : index
    %15 = vector.load %arg6[%c0_12, %c0_13] : memref<1x64xf32, #tpu.memory_space<vmem>>, vector<1x64xf32>
    "tpu.trace_start"() <{level = 10 : i32, message = "oh,bh->ob"}> : () -> ()
    %cst_14 = arith.constant dense<0.000000e+00> : vector<1x8xf32>
    %16 = tpu.matmul %15, %14, %cst_14 {dimension_numbers = #tpu.dot_dimension_numbers<[1], [1], [0], [0], [0, 0, 1, 0], [], []>} : vector<1x64xf32>, vector<8x64xf32>, vector<1x8xf32> -> vector<1x8xf32>
    "tpu.trace_stop"() : () -> ()
    %c0_15 = arith.constant 0 : index
    %c0_16 = arith.constant 0 : index
    %17 = vector.load %arg7[%c0_15, %c0_16] : memref<1x1xf32, #tpu.memory_space<vmem>>, vector<1x1xf32>
    %18 = vector.broadcast %17 : vector<1x1xf32> to vector<1x8xf32>
    %19 = arith.addf %16, %18 : vector<1x8xf32>
    %20 = vector.shape_cast %19 : vector<1x8xf32> to vector<1x1x8xf32>
    %c0_17 = arith.constant 0 : index
    %c0_18 = arith.constant 0 : index
    %c0_19 = arith.constant 0 : index
    %21 = vector.load %arg8[%c0_17, %c0_18, %c0_19] : memref<1x1x8xf32, #tpu.memory_space<vmem>>, vector<1x1x8xf32>
    tpu.vector_store %arg8[%c0_17, %c0_18, %c0_19], %20 {strides = array<i32>} : memref<1x1x8xf32, #tpu.memory_space<vmem>>, vector<1x1x8xf32>,
    return
  }
  func.func @transform_0(%arg0: i32) -> (i32, i32) {
    %c0_i32 = arith.constant 0 : i32
    %c0_i32_0 = arith.constant 0 : i32
    return %arg0, %c0_i32 : i32, i32
  }
  func.func @transform_1(%arg0: i32) -> (i32, i32) {
    %c0_i32 = arith.constant 0 : i32
    %c0_i32_0 = arith.constant 0 : i32
    %c0_i32_1 = arith.constant 0 : i32
    return %c0_i32, %c0_i32_0 : i32, i32
  }
  func.func @transform_2(%arg0: i32) -> (i32, i32) {
    %c0_i32 = arith.constant 0 : i32
    %c0_i32_0 = arith.constant 0 : i32
    %c0_i32_1 = arith.constant 0 : i32
    return %c0_i32, %c0_i32_0 : i32, i32
  }
  func.func @transform_3(%arg0: i32) -> (i32, i32) {
    %c0_i32 = arith.constant 0 : i32
    %c0_i32_0 = arith.constant 0 : i32
    %c0_i32_1 = arith.constant 0 : i32
    return %c0_i32, %c0_i32_0 : i32, i32
  }
  func.func @transform_4(%arg0: i32) -> (i32, i32) {
    %c0_i32 = arith.constant 0 : i32
    %c0_i32_0 = arith.constant 0 : i32
    %c0_i32_1 = arith.constant 0 : i32
    return %c0_i32, %c0_i32_0 : i32, i32
  }
  func.func @transform_5(%arg0: i32) -> (i32, i32) {
    %c0_i32 = arith.constant 0 : i32
    %c0_i32_0 = arith.constant 0 : i32
    %c0_i32_1 = arith.constant 0 : i32
    return %c0_i32, %c0_i32_0 : i32, i32
  }
  func.func @transform_6(%arg0: i32) -> (i32, i32) {
    %c0_i32 = arith.constant 0 : i32
    %c0_i32_0 = arith.constant 0 : i32
    %c0_i32_1 = arith.constant 0 : i32
    return %c0_i32, %c0_i32_0 : i32, i32
  }
  func.func @transform_7(%arg0: i32) -> (i32, i32, i32) {
    %c0_i32 = arith.constant 0 : i32
    %c0_i32_0 = arith.constant 0 : i32
    %c0_i32_1 = arith.constant 0 : i32
    return %arg0, %c0_i32, %c0_i32_0 : i32, i32, i32
  }
}

</mosaic_0001>

<llo_original>
// kernel: tpu_custom_call.1
$region0: #{tpu_custom_call.1}
  #allocation0 [shape = 'u32[]', space=smem, size = 0x4, offset = 0x4, fixed_abs, tag = 'smem constant byte address 0x4 - core index']
  #allocation1 [shape = 'u32[144,128]{1,0:T(1,128)}', space=vmem, size = 0x12000, scoped, tag = 'internal scratch']
  #allocation2 [shape = 'f32[1,1]{1,0:T(1,128)S(1)}', space=vmem, size = 0x200, scoped, tag = 'scoped memory for tpu_custom_call.1']
  %s0 = inlined_call_operand.hbm [shape: f32[8,16], index: 0, kind: input, shape index: {}]
  %s1 = inlined_call_operand.hbm [shape: f32[16,32], index: 1, kind: input, shape index: {}]
  %s2 = inlined_call_operand.vmem [shape: f32[1,32], index: 2, kind: input, shape index: {}]
  %s3 = inlined_call_operand.hbm [shape: f32[32,64], index: 3, kind: input, shape index: {}]
  %s4 = inlined_call_operand.vmem [shape: f32[1,64], index: 4, kind: input, shape index: {}]
  %s5 = inlined_call_operand.vmem [shape: f32[1,64], index: 5, kind: input, shape index: {}]
  %s6 = inlined_call_operand.<no memory space> [shape: f32[1,1], index: 6, kind: input, shape index: {}]
  %s7 = inlined_call_operand.hbm [shape: f32[1,1,8], index: 7, kind: output, shape index: {}]
  %s8 = sld [smem:[#allocation0]]
  $region50: #{tpu_custom_call.1} parent=0
    _
  %s10 = ssub.s32 1, %s8
  %s11 = scalar_select 0, %s10, %s8
  %v12 = vstv %s6
  %13 = vst [vmem:[#allocation2] sm:$0x1] %v12
  $region1: #{tpu_custom_call.1} parent=0
    #allocation3 [shape = 'u8[4096]{0}', space=vmem, size = 0x1000, scoped, tag = 'input window, operand 0, single buffered']
    #allocation4 [shape = 's32[1]{0}', space=sflag, size = 0x4, scoped, tag = 'scoped memory for tpu_custom_call.1']
    #allocation5 [shape = 's32[1]{0}', space=sflag, size = 0x4, scoped, tag = 'scoped memory for tpu_custom_call.1']
    #allocation6 [shape = 'u8[8192]{0}', space=vmem, size = 0x2000, scoped, tag = 'input window, operand 1, single buffered']
    #allocation7 [shape = 's32[1]{0}', space=sflag, size = 0x4, scoped, tag = 'scoped memory for tpu_custom_call.1']
    #allocation8 [shape = 'u8[16384]{0}', space=vmem, size = 0x4000, scoped, tag = 'input window, operand 3, single buffered']
    #allocation9 [shape = 'u8[512]{0}', space=vmem, size = 0x400, scoped, tag = 'output window, operand 0, single buffered']
    %14 = vsyncpa [#allocation4], 0
    %15 = vsyncpa [#allocation7], 0
    %16 = vsyncpa [#allocation5], 0
    // Predicated region
    $region2: #{tpu_custom_call.1} parent=1 // pred_check
      _
    $region3: #{tpu_custom_call.1} parent=1 // pred_check_branch
      %18 = sbr.rel (0) target = $region5
    $region4: #{tpu_custom_call.1} parent=1 // pred_region
      %s20 = ssub.s32 128, 128
      %21 = vsyncadd [#allocation4], %s20
      %s23 = sshll.u32 [#allocation3], 4
      %s24 = int_to_ptr.vmem [resolvable:$true] %s23
      %26 = dma.hbm_to_vmem [thread:$0]  %s0, 128, %s24, [#allocation4]
    $region5: #{tpu_custom_call.1} parent=1 // pred_fallthru
      _
    // Predicated region
    $region6: #{tpu_custom_call.1} parent=1 // pred_check
      _
    $region7: #{tpu_custom_call.1} parent=1 // pred_check_branch
      %28 = sbr.rel (0) target = $region9
    $region8: #{tpu_custom_call.1} parent=1 // pred_region
      %s30 = ssub.s32 256, 256
      %31 = vsyncadd [#allocation7], %s30
      %s32 = sshll.u32 [#allocation6], 4
      %s33 = int_to_ptr.vmem [resolvable:$true] %s32
      %38 = dma.hbm_to_vmem [thread:$0]  %s1, 256, %s33, [#allocation7], 128, 128, 8
    $region9: #{tpu_custom_call.1} parent=1 // pred_fallthru
      _
    // Predicated region
    $region10: #{tpu_custom_call.1} parent=1 // pred_check
      _
    $region11: #{tpu_custom_call.1} parent=1 // pred_check_branch
      %40 = sbr.rel (0) target = $region13
    $region12: #{tpu_custom_call.1} parent=1 // pred_region
      _
    $region13: #{tpu_custom_call.1} parent=1 // pred_fallthru
      _
    // Predicated region
    $region14: #{tpu_custom_call.1} parent=1 // pred_check
      _
    $region15: #{tpu_custom_call.1} parent=1 // pred_check_branch
      %42 = sbr.rel (0) target = $region17
    $region16: #{tpu_custom_call.1} parent=1 // pred_region
      %s44 = ssub.s32 512, 512
      %45 = vsyncadd [#allocation7], %s44
      %s46 = sshll.u32 [#allocation8], 4
      %s47 = int_to_ptr.vmem [resolvable:$true] %s46
      %52 = dma.hbm_to_vmem [thread:$0]  %s3, 512, %s47, [#allocation7], 128, 128, 8
    $region17: #{tpu_custom_call.1} parent=1 // pred_fallthru
      _
    // Predicated region
    $region18: #{tpu_custom_call.1} parent=1 // pred_check
      _
    $region19: #{tpu_custom_call.1} parent=1 // pred_check_branch
      %54 = sbr.rel (0) target = $region21
    $region20: #{tpu_custom_call.1} parent=1 // pred_region
      _
    $region21: #{tpu_custom_call.1} parent=1 // pred_fallthru
      _
    // Predicated region
    $region22: #{tpu_custom_call.1} parent=1 // pred_check
      _
    $region23: #{tpu_custom_call.1} parent=1 // pred_check_branch
      %56 = sbr.rel (0) target = $region25
    $region24: #{tpu_custom_call.1} parent=1 // pred_region
      _
    $region25: #{tpu_custom_call.1} parent=1 // pred_fallthru
      _
    // Predicated region
    $region26: #{tpu_custom_call.1} parent=1 // pred_check
      _
    $region27: #{tpu_custom_call.1} parent=1 // pred_check_branch
      %58 = sbr.rel (0) target = $region29
    $region28: #{tpu_custom_call.1} parent=1 // pred_region
      _
    $region29: #{tpu_custom_call.1} parent=1 // pred_fallthru
      _
    // Predicated region
    $region30: #{tpu_custom_call.1} parent=1 // pred_check
      _
    $region31: #{tpu_custom_call.1} parent=1 // pred_check_branch
      %60 = sbr.rel (0) target = $region33
    $region32: #{tpu_custom_call.1} parent=1 // pred_region
      %61 = dma.done [#allocation4], 128
    $region33: #{tpu_custom_call.1} parent=1 // pred_fallthru
      _
    // Predicated region
    $region34: #{tpu_custom_call.1} parent=1 // pred_check
      _
    $region35: #{tpu_custom_call.1} parent=1 // pred_check_branch
      %63 = sbr.rel (0) target = $region37
    $region36: #{tpu_custom_call.1} parent=1 // pred_region
      %64 = dma.done [#allocation7], 256
    $region37: #{tpu_custom_call.1} parent=1 // pred_fallthru
      _
    // Predicated region
    $region38: #{tpu_custom_call.1} parent=1 // pred_check
      _
    $region39: #{tpu_custom_call.1} parent=1 // pred_check_branch
      %66 = sbr.rel (0) target = $region41
    $region40: #{tpu_custom_call.1} parent=1 // pred_region
      %67 = dma.done [#allocation7], 512
    $region41: #{tpu_custom_call.1} parent=1 // pred_fallthru
      _
    %v68 = vld [vmem:[#allocation3] sm:$0xff]
    %v69 = vld [vmem:[#allocation6] sm:$0xff]
    %v70 = vld [vmem:[#allocation6 + $0x8] sm:$0xff]
    %v71 = vld [vmem:[%s2] sm:$0x1]
    %v73 = vlaneseq
    %v74 = vshrl.u32 %v73, 7
    %v75 = vsub.s32 0, %v74
    %v76 = vrot.slane %v71, %v75
    %vm78 = vcmask 130048
    %v80 = vsel %vm78, %v68, 0
    %82 = vmatprep.subr.mxu0 0.0
    %83 = vmatpush1.msra.mxu0 %v69
    %84 = vmatprep.subr.mxu0 0.0
    %85 = vmatpush1.msra.mxu0 %v70
    %86 = vmatprep.subr.mxu0 0.0
    %87 = vmatpush1.msra.mxu0 0.0
    %88 = vmatprep.subr.mxu0 0.0
    %89 = vmatpush1.msra.mxu0 0.0
    %90 = vmatprep.subr.mxu0 0.0
    %91 = vmatpush1.msra.mxu0 0.0
    %92 = vmatprep.subr.mxu0 0.0
    %93 = vmatpush1.msra.mxu0 0.0
    %94 = vmatprep.subr.mxu0 0.0
    %95 = vmatpush1.msra.mxu0 0.0
    %96 = vmatprep.subr.mxu0 0.0
    %97 = vmatpush1.msra.mxu0 0.0
    %98 = vmatprep.subr.mxu0 0.0
    %99 = vmatpush1.msra.mxu0 0.0
    %100 = vmatprep.subr.mxu0 0.0
    %101 = vmatpush1.msra.mxu0 0.0
    %102 = vmatprep.subr.mxu0 0.0
    %103 = vmatpush1.msra.mxu0 0.0
    %104 = vmatprep.subr.mxu0 0.0
    %105 = vmatpush1.msra.mxu0 0.0
    %106 = vmatprep.subr.mxu0 0.0
    %107 = vmatpush1.msra.mxu0 0.0
    %108 = vmatprep.subr.mxu0 0.0
    %109 = vmatpush1.msra.mxu0 0.0
    %110 = vmatprep.subr.mxu0 0.0
    %111 = vmatpush1.msra.mxu0 0.0
    %112 = vmatprep.subr.mxu0 0.0
    %113 = vmatpush1.msra.mxu0 0.0
    %114 = vmatprep.subr.mxu0 0.0
    %115 = vmatpush1.msra.mxu0 0.0
    %116 = vmatprep.subr.mxu0 0.0
    %117 = vmatpush1.msra.mxu0 0.0
    %118 = vmatprep.subr.mxu0 0.0
    %119 = vmatpush1.msra.mxu0 0.0
    %120 = vmatprep.subr.mxu0 0.0
    %121 = vmatpush1.msra.mxu0 0.0
    %122 = vmatprep.subr.mxu0 0.0
    %123 = vmatpush1.msra.mxu0 0.0
    %124 = vmatprep.subr.mxu0 0.0
    %125 = vmatpush1.msra.mxu0 0.0
    %126 = vmatprep.subr.mxu0 0.0
    %127 = vmatpush1.msra.mxu0 0.0
    %128 = vmatprep.subr.mxu0 0.0
    %129 = vmatpush1.msra.mxu0 0.0
    %130 = vmatprep.subr.mxu0 0.0
    %131 = vmatpush1.msra.mxu0 0.0
    %132 = vmatprep.subr.mxu0 0.0
    %133 = vmatpush1.msra.mxu0 0.0
    %134 = vmatprep.subr.mxu0 0.0
    %135 = vmatpush1.msra.mxu0 0.0
    %136 = vmatprep.subr.mxu0 0.0
    %137 = vmatpush1.msra.mxu0 0.0
    %138 = vmatprep.subr.mxu0 0.0
    %139 = vmatpush1.msra.mxu0 0.0
    %140 = vmatprep.subr.mxu0 0.0
    %141 = vmatpush1.msra.mxu0 0.0
    %142 = vmatprep.subr.mxu0 0.0
    %143 = vmatpush1.msra.mxu0 0.0
    %144 = vmatprep.subr.mxu0 0.0
    %145 = vmatpush1.msra.mxu0 0.0
    %146 = vmatprep.mubr.f32.mxu0 0.0
    %147 = vmatmul.mubr.f32.gmra.mrb[0].mxu0 %v80
    %v148 = vpop.f32.mrb[0].mxu0
    %v149 = vadd.f32 %v76, %v148
    %v150 = vpop.f32.mrb[0].mxu0
    %151 = vdwg.mxu0
    %v152 = vmax.f32 %v149, 0.0
    %v153 = vld [vmem:[#allocation8] sm:$0xff]
    %v154 = vld [vmem:[#allocation8 + $0x8] sm:$0xff]
    %v155 = vld [vmem:[#allocation8 + $0x10] sm:$0xff]
    %v156 = vld [vmem:[#allocation8 + $0x18] sm:$0xff]
    %v157 = vld [vmem:[%s4] sm:$0x1]
    %v159 = vlaneseq
    %v160 = vshrl.u32 %v159, 7
    %v161 = vsub.s32 0, %v160
    %v162 = vrot.slane %v157, %v161
    %vm164 = vcmask 261120
    %v166 = vsel %vm164, %v152, 0
    %168 = vmatprep.subr.mxu0 0.0
    %169 = vmatpush1.msra.mxu0 %v153
    %170 = vmatprep.subr.mxu0 0.0
    %171 = vmatpush1.msra.mxu0 %v154
    %172 = vmatprep.subr.mxu0 0.0
    %173 = vmatpush1.msra.mxu0 %v155
    %174 = vmatprep.subr.mxu0 0.0
    %175 = vmatpush1.msra.mxu0 %v156
    %176 = vmatprep.subr.mxu0 0.0
    %177 = vmatpush1.msra.mxu0 0.0
    %178 = vmatprep.subr.mxu0 0.0
    %179 = vmatpush1.msra.mxu0 0.0
    %180 = vmatprep.subr.mxu0 0.0
    %181 = vmatpush1.msra.mxu0 0.0
    %182 = vmatprep.subr.mxu0 0.0
    %183 = vmatpush1.msra.mxu0 0.0
    %184 = vmatprep.subr.mxu0 0.0
    %185 = vmatpush1.msra.mxu0 0.0
    %186 = vmatprep.subr.mxu0 0.0
    %187 = vmatpush1.msra.mxu0 0.0
    %188 = vmatprep.subr.mxu0 0.0
    %189 = vmatpush1.msra.mxu0 0.0
    %190 = vmatprep.subr.mxu0 0.0
    %191 = vmatpush1.msra.mxu0 0.0
    %192 = vmatprep.subr.mxu0 0.0
    %193 = vmatpush1.msra.mxu0 0.0
    %194 = vmatprep.subr.mxu0 0.0
    %195 = vmatpush1.msra.mxu0 0.0
    %196 = vmatprep.subr.mxu0 0.0
    %197 = vmatpush1.msra.mxu0 0.0
    %198 = vmatprep.subr.mxu0 0.0
    %199 = vmatpush1.msra.mxu0 0.0
    %200 = vmatprep.subr.mxu0 0.0
    %201 = vmatpush1.msra.mxu0 0.0
    %202 = vmatprep.subr.mxu0 0.0
    %203 = vmatpush1.msra.mxu0 0.0
    %204 = vmatprep.subr.mxu0 0.0
    %205 = vmatpush1.msra.mxu0 0.0
    %206 = vmatprep.subr.mxu0 0.0
    %207 = vmatpush1.msra.mxu0 0.0
    %208 = vmatprep.subr.mxu0 0.0
    %209 = vmatpush1.msra.mxu0 0.0
    %210 = vmatprep.subr.mxu0 0.0
    %211 = vmatpush1.msra.mxu0 0.0
    %212 = vmatprep.subr.mxu0 0.0
    %213 = vmatpush1.msra.mxu0 0.0
    %214 = vmatprep.subr.mxu0 0.0
    %215 = vmatpush1.msra.mxu0 0.0
    %216 = vmatprep.subr.mxu0 0.0
    %217 = vmatpush1.msra.mxu0 0.0
    %218 = vmatprep.subr.mxu0 0.0
    %219 = vmatpush1.msra.mxu0 0.0
    %220 = vmatprep.subr.mxu0 0.0
    %221 = vmatpush1.msra.mxu0 0.0
    %222 = vmatprep.subr.mxu0 0.0
    %223 = vmatpush1.msra.mxu0 0.0
    %224 = vmatprep.subr.mxu0 0.0
    %225 = vmatpush1.msra.mxu0 0.0
    %226 = vmatprep.subr.mxu0 0.0
    %227 = vmatpush1.msra.mxu0 0.0
    %228 = vmatprep.subr.mxu0 0.0
    %229 = vmatpush1.msra.mxu0 0.0
    %230 = vmatprep.subr.mxu0 0.0
    %231 = vmatpush1.msra.mxu0 0.0
    %232 = vmatprep.mubr.f32.mxu0 0.0
    %233 = vmatmul.mubr.f32.gmra.mrb[0].mxu0 %v166
    %v234 = vpop.f32.mrb[0].mxu0
    %v235 = vadd.f32 %v162, %v234
    %v236 = vpop.f32.mrb[0].mxu0
    %237 = vdwg.mxu0
    %v238 = vmax.f32 %v235, 0.0
    %v239 = vld [vmem:[%s5] sm:$0x1]
    %v240 = vld [vmem:[#allocation2] sm:$0x1]
    %242 = vset.pattern.permute.xlu0 0
    %243 = vperm.xlu0 %242, %v240
    %v244 = vpop.permute.xlu0 %243
    %v246 = vlaneseq
    %v247 = vshrl.u32 %v246, 7
    %v248 = vsub.s32 0, %v247
    %v249 = vrot.slane %v244, %v248
    %vm250 = vcmask 523264
    %v252 = vsel %vm250, %v239, 0
    %v255 = vsel %vm250, %v238, 0
    %257 = vmatprep.subr.mxu0 0.0
    %258 = vmatpush1.xpose.msra.mxu0 %v255
    %259 = vmatprep.subr.mxu0 0.0
    %260 = vmatpush1.xpose.msra.mxu0 0.0
    %261 = vmatprep.subr.mxu0 0.0
    %262 = vmatpush1.xpose.msra.mxu0 0.0
    %263 = vmatprep.subr.mxu0 0.0
    %264 = vmatpush1.xpose.msra.mxu0 0.0
    %265 = vmatprep.subr.mxu0 0.0
    %266 = vmatpush1.xpose.msra.mxu0 0.0
    %267 = vmatprep.subr.mxu0 0.0
    %268 = vmatpush1.xpose.msra.mxu0 0.0
    %269 = vmatprep.subr.mxu0 0.0
    %270 = vmatpush1.xpose.msra.mxu0 0.0
    %271 = vmatprep.subr.mxu0 0.0
    %272 = vmatpush1.xpose.msra.mxu0 0.0
    %273 = vmatprep.subr.mxu0 0.0
    %274 = vmatpush1.xpose.msra.mxu0 0.0
    %275 = vmatprep.subr.mxu0 0.0
    %276 = vmatpush1.xpose.msra.mxu0 0.0
    %277 = vmatprep.subr.mxu0 0.0
    %278 = vmatpush1.xpose.msra.mxu0 0.0
    %279 = vmatprep.subr.mxu0 0.0
    %280 = vmatpush1.xpose.msra.mxu0 0.0
    %281 = vmatprep.subr.mxu0 0.0
    %282 = vmatpush1.xpose.msra.mxu0 0.0
    %283 = vmatprep.subr.mxu0 0.0
    %284 = vmatpush1.xpose.msra.mxu0 0.0
    %285 = vmatprep.subr.mxu0 0.0
    %286 = vmatpush1.xpose.msra.mxu0 0.0
    %287 = vmatprep.subr.mxu0 0.0
    %288 = vmatpush1.xpose.msra.mxu0 0.0
    %289 = vmatprep.subr.mxu0 0.0
    %290 = vmatpush1.xpose.msra.mxu0 0.0
    %291 = vmatprep.subr.mxu0 0.0
    %292 = vmatpush1.xpose.msra.mxu0 0.0
    %293 = vmatprep.subr.mxu0 0.0
    %294 = vmatpush1.xpose.msra.mxu0 0.0
    %295 = vmatprep.subr.mxu0 0.0
    %296 = vmatpush1.xpose.msra.mxu0 0.0
    %297 = vmatprep.subr.mxu0 0.0
    %298 = vmatpush1.xpose.msra.mxu0 0.0
    %299 = vmatprep.subr.mxu0 0.0
    %300 = vmatpush1.xpose.msra.mxu0 0.0
    %301 = vmatprep.subr.mxu0 0.0
    %302 = vmatpush1.xpose.msra.mxu0 0.0
    %303 = vmatprep.subr.mxu0 0.0
    %304 = vmatpush1.xpose.msra.mxu0 0.0
    %305 = vmatprep.subr.mxu0 0.0
    %306 = vmatpush1.xpose.msra.mxu0 0.0
    %307 = vmatprep.subr.mxu0 0.0
    %308 = vmatpush1.xpose.msra.mxu0 0.0
    %309 = vmatprep.subr.mxu0 0.0
    %310 = vmatpush1.xpose.msra.mxu0 0.0
    %311 = vmatprep.subr.mxu0 0.0
    %312 = vmatpush1.xpose.msra.mxu0 0.0
    %313 = vmatprep.subr.mxu0 0.0
    %314 = vmatpush1.xpose.msra.mxu0 0.0
    %315 = vmatprep.subr.mxu0 0.0
    %316 = vmatpush1.xpose.msra.mxu0 0.0
    %317 = vmatprep.subr.mxu0 0.0
    %318 = vmatpush1.xpose.msra.mxu0 0.0
    %319 = vmatprep.subr.mxu0 0.0
    %320 = vmatpush1.xpose.msra.mxu0 0.0
    %321 = vmatprep.mubr.f32.mxu0 0.0
    %322 = vmatmul.mubr.f32.gmra.mrb[0].mxu0 %v252
    %v323 = vpop.f32.mrb[0].mxu0
    %v324 = vadd.f32 %v249, %v323
    %v325 = vpop.f32.mrb[0].mxu0
    %326 = vdwg.mxu0
    %vm327 = vcmask 57344
    %328 = vst.msk [vmem:[#allocation9] sm:$0x1] %vm327, %v324
    // Predicated region
    $region42: #{tpu_custom_call.1} parent=1 // pred_check
      _
    $region43: #{tpu_custom_call.1} parent=1 // pred_check_branch
      %330 = sbr.rel (0) target = $region45
    $region44: #{tpu_custom_call.1} parent=1 // pred_region
      %s332 = ssub.s32 16, 16
      %333 = vsyncadd [#allocation5], %s332
      %s335 = sshll.u32 [#allocation9], 4
      %s336 = int_to_ptr.vmem [resolvable:$true] %s335
      %338 = dma.vmem_to_hbm [thread:$0]  %s336, 16, %s7, [#allocation5]
    $region45: #{tpu_custom_call.1} parent=1 // pred_fallthru
      _
    // Predicated region
    $region46: #{tpu_custom_call.1} parent=1 // pred_check
      _
    $region47: #{tpu_custom_call.1} parent=1 // pred_check_branch
      %340 = sbr.rel (0) target = $region49
    $region48: #{tpu_custom_call.1} parent=1 // pred_region
      %341 = dma.done [#allocation5], 16
    $region49: #{tpu_custom_call.1} parent=1 // pred_fallthru
      _
    %342 = vsyncpa [#allocation4], 1
    %343 = vsyncpa [#allocation7], 1
    %344 = vsyncpa [#allocation5], 1

</llo_original>
